<compile_context>
chip_gen: v5e
topology: v5e:2x2
jax: 0.10.0
libtpu: 0.0.40
codegen_flags: <defaults>
</compile_context>

<pallas_src>
import functools

import jax
import jax.numpy as jnp
from jax.experimental import pallas as pl
from jax.experimental.pallas import tpu as pltpu


def _round_up(x, m):
    return ((x + m - 1) // m) * m


def _ffn_fused_kernel(*refs, num_layers, leaky):
    """Fused FFN on one M tile: for each layer i:
       (activate if i > 0) -> h @ W_i^T + b_i, all in VMEM / registers."""
    x_ref = refs[0]
    o_ref = refs[-1]
    wb = refs[1:-1]                      # w0, b0, w1, b1, ...
    compute_dtype = x_ref.dtype

    h = x_ref[...]
    for i in range(num_layers):
        w_ref = wb[2 * i]
        b_ref = wb[2 * i + 1]
        if i != 0:
            # Activation in the native compute dtype (bf16 on v6e/v7x, f32 on v5e).
            if leaky:
                h = jnp.where(h >= 0.0, h, 0.01 * h)
            else:
                h = jnp.maximum(h, 0.0)
        # Native-dtype operands into the MXU, f32 accumulation.
        y = jnp.dot(h, w_ref[...], preferred_element_type=jnp.float32)
        # Bias: one (1, N) broadcast add per output tile, outside any hot loop.
        y = y + b_ref[...].astype(jnp.float32)
        if i + 1 < num_layers:
            h = y.astype(compute_dtype)   # feed the next matmul natively
        else:
            h = y
    o_ref[...] = h.astype(o_ref.dtype)


def positionwise_feed_forward(x, weights, biases, ff_activate="relu",
                              block_m=256):
    """Matches Positionwise_FeedForward.forward with dropout p = 0.

    x: (..., sizes[0]); weights[i]: (sizes[i+1], sizes[i]) (PyTorch Linear
    convention); biases[i]: (sizes[i+1],).
    """
    assert len(weights) == len(biases) and len(weights) >= 1
    leaky = (ff_activate == "leaky")
    num_layers = len(weights)

    lead = x.shape[:-1]
    d_in = x.shape[-1]
    d_out = weights[-1].shape[0]

    x2 = x.reshape(-1, d_in)
    m = x2.shape[0]

    # M tile: multiple of 8 (sublane); small inputs get a single exact tile.
    tm = min(block_m, _round_up(m, 8))
    m_pad = _round_up(m, tm)
    if m_pad != m:
        x2 = jnp.pad(x2, ((0, m_pad - m), (0, 0)))

    # Pre-transpose weights to (in, out); biases to (1, out) -- once, on host/XLA.
    w_ts = [jnp.transpose(w) for w in weights]
    b2s = [b.reshape(1, -1) for b in biases]

    operands = [x2]
    in_specs = [pl.BlockSpec((tm, d_in), lambda i: (i, 0))]
    for w_t, b2 in zip(w_ts, b2s):
        operands.append(w_t)
        in_specs.append(pl.BlockSpec(w_t.shape, lambda i: (0, 0)))   # resident
        operands.append(b2)
        in_specs.append(pl.BlockSpec(b2.shape, lambda i: (0, 0)))    # resident

    # Rough VMEM budget: double-buffered x/out tiles + resident weights/biases
    # + f32 intermediates.  Clamp to [32 MiB, 64 MiB] (v7x-safe).
    itemsize = x2.dtype.itemsize
    widest = max([d_in] + [w.shape[1] for w in w_ts])
    est = (2 * tm * d_in * itemsize
           + 2 * sum(a.size * a.dtype.itemsize for a in operands[1:])
           + 2 * tm * d_out * itemsize
           + 2 * tm * widest * 4)
    vmem_limit = int(min(max(2 * est, 32 * 1024 * 1024), 64 * 1024 * 1024))

    kernel = functools.partial(_ffn_fused_kernel,
                               num_layers=num_layers, leaky=leaky)
    out = pl.pallas_call(
        kernel,
        out_shape=jax.ShapeDtypeStruct((m_pad, d_out), x.dtype),
        grid=(m_pad // tm,),
        in_specs=in_specs,
        out_specs=pl.BlockSpec((tm, d_out), lambda i: (i, 0)),
        compiler_params=pltpu.CompilerParams(
            dimension_semantics=("parallel",),
            vmem_limit_bytes=vmem_limit),
    )(*operands)

    if m_pad != m:
        out = out[:m]
    return out.reshape(lead + (d_out,))


def _reference(x, weights, biases, ff_activate="relu"):
    out = x
    for i, (w, b) in enumerate(zip(weights, biases)):
        if i != 0:
            if ff_activate == "leaky":
                out = jnp.where(out >= 0.0, out, 0.01 * out)
            else:
                out = jnp.maximum(out, 0.0)
        out = out @ w.T + b
    return out


def _make_params(key, sizes, dtype=jnp.float32):
    ks = jax.random.split(key, 2 * (len(sizes) - 1))
    weights, biases = [], []
    for i in range(len(sizes) - 1):
        fan_in = sizes[i]
        bound = 1.0 / float(fan_in) ** 0.5
        w = jax.random.uniform(ks[2 * i], (sizes[i + 1], sizes[i]),
                               minval=-bound, maxval=bound, dtype=dtype)
        b = jax.random.uniform(ks[2 * i + 1], (sizes[i + 1],),
                               minval=-bound, maxval=bound, dtype=dtype)
        weights.append(w)
        biases.append(b)
    return weights, biases


if __name__ == "__main__":
    key = jax.random.PRNGKey(0)
    sizes = (32, 64, 32)   # num_layers = 2: Linear(32,64), Linear(64,32)

    k_x1, k_x2, k_p = jax.random.split(key, 3)
    weights, biases = _make_params(k_p, sizes)

    # Case 1: relu, M divisible by 8 (batch=2, seq=8).
    x1 = jax.random.normal(k_x1, (2, 8, sizes[0]), dtype=jnp.float32)
    out1 = jax.block_until_ready(
        positionwise_feed_forward(x1, weights, biases, ff_activate="relu"))
    ref1 = _reference(x1, weights, biases, ff_activate="relu")
    assert out1.shape == (2, 8, sizes[-1])
    assert jnp.allclose(out1, ref1, atol=1e-5, rtol=1e-5)

    # Case 2: leaky, M not a multiple of 8 (exercises the padding path).
    x2 = jax.random.normal(k_x2, (3, 5, sizes[0]), dtype=jnp.float32)
    out2 = jax.block_until_ready(
        positionwise_feed_forward(x2, weights, biases, ff_activate="leaky"))
    ref2 = _reference(x2, weights, biases, ff_activate="leaky")
    assert out2.shape == (3, 5, sizes[-1])
    assert jnp.allclose(out2, ref2, atol=1e-5, rtol=1e-5)

    print("KERNEL_OK")
</pallas_src>

<mosaic_0001>
module attributes {stable_mosaic.version = 11 : i64} {
  func.func @_ffn_fused_kernel(%arg0: i32, %arg1: memref<16x32xf32, #tpu.memory_space<vmem>>, %arg2: memref<32x64xf32, #tpu.memory_space<vmem>>, %arg3: memref<1x64xf32, #tpu.memory_space<vmem>>, %arg4: memref<64x32xf32, #tpu.memory_space<vmem>>, %arg5: memref<1x32xf32, #tpu.memory_space<vmem>>, %arg6: memref<16x32xf32, #tpu.memory_space<vmem>>) attributes {dimension_semantics = [#tpu.dimension_semantics<parallel>], iteration_bounds = array<i64: 1>, scalar_prefetch = 0 : i64, scratch_operands = 0 : i64, tpu.core_type = #tpu.core_type<tc>, window_params = [{transform_indices = @transform_0, window_bounds = array<i64: 16, 32>}, {pipeline_mode = #tpu.pipeline_mode<synchronous>, transform_indices = @transform_1, window_bounds = array<i64: 32, 64>}, {pipeline_mode = #tpu.pipeline_mode<synchronous>, transform_indices = @transform_2, window_bounds = array<i64: 1, 64>}, {pipeline_mode = #tpu.pipeline_mode<synchronous>, transform_indices = @transform_3, window_bounds = array<i64: 64, 32>}, {pipeline_mode = #tpu.pipeline_mode<synchronous>, transform_indices = @transform_4, window_bounds = array<i64: 1, 32>}, {transform_indices = @transform_5, window_bounds = array<i64: 16, 32>}]} {
    %c0 = arith.constant 0 : index
    %c0_0 = arith.constant 0 : index
    %0 = vector.load %arg1[%c0, %c0_0] : memref<16x32xf32, #tpu.memory_space<vmem>>, vector<16x32xf32>
    %c0_1 = arith.constant 0 : index
    %c0_2 = arith.constant 0 : index
    %1 = vector.load %arg2[%c0_1, %c0_2] : memref<32x64xf32, #tpu.memory_space<vmem>>, vector<32x64xf32>
    %cst = arith.constant dense<0.000000e+00> : vector<16x64xf32>
    %2 = tpu.matmul %0, %1, %cst {dimension_numbers = #tpu.dot_dimension_numbers<[1], [0], [0], [1], [0, 0, 1, 1], [], []>} : vector<16x32xf32>, vector<32x64xf32>, vector<16x64xf32> -> vector<16x64xf32>
    %c0_3 = arith.constant 0 : index
    %c0_4 = arith.constant 0 : index
    %3 = vector.load %arg3[%c0_3, %c0_4] : memref<1x64xf32, #tpu.memory_space<vmem>>, vector<1x64xf32>
    %4 = vector.broadcast %3 : vector<1x64xf32> to vector<16x64xf32>
    %5 = arith.addf %2, %4 : vector<16x64xf32>
    %cst_5 = arith.constant 0.000000e+00 : f32
    %6 = vector.broadcast %cst_5 : f32 to vector<16x64xf32>
    %7 = arith.maximumf %5, %6 : vector<16x64xf32>
    %c0_6 = arith.constant 0 : index
    %c0_7 = arith.constant 0 : index
    %8 = vector.load %arg4[%c0_6, %c0_7] : memref<64x32xf32, #tpu.memory_space<vmem>>, vector<64x32xf32>
    %cst_8 = arith.constant dense<0.000000e+00> : vector<16x32xf32>
    %9 = tpu.matmul %7, %8, %cst_8 {dimension_numbers = #tpu.dot_dimension_numbers<[1], [0], [0], [1], [0, 0, 1, 1], [], []>} : vector<16x64xf32>, vector<64x32xf32>, vector<16x32xf32> -> vector<16x32xf32>
    %c0_9 = arith.constant 0 : index
    %c0_10 = arith.constant 0 : index
    %10 = vector.load %arg5[%c0_9, %c0_10] : memref<1x32xf32, #tpu.memory_space<vmem>>, vector<1x32xf32>
    %11 = vector.broadcast %10 : vector<1x32xf32> to vector<16x32xf32>
    %12 = arith.addf %9, %11 : vector<16x32xf32>
    %c0_11 = arith.constant 0 : index
    %c0_12 = arith.constant 0 : index
    %13 = vector.load %arg6[%c0_11, %c0_12] : memref<16x32xf32, #tpu.memory_space<vmem>>, vector<16x32xf32>
    tpu.vector_store %arg6[%c0_11, %c0_12], %12 {strides = array<i32>} : memref<16x32xf32, #tpu.memory_space<vmem>>, vector<16x32xf32>,
    return
  }
  func.func @transform_0(%arg0: i32) -> (i32, i32) {
    %c0_i32 = arith.constant 0 : i32
    %c0_i32_0 = arith.constant 0 : i32
    return %arg0, %c0_i32 : i32, i32
  }
  func.func @transform_1(%arg0: i32) -> (i32, i32) {
    %c0_i32 = arith.constant 0 : i32
    %c0_i32_0 = arith.constant 0 : i32
    %c0_i32_1 = arith.constant 0 : i32
    return %c0_i32, %c0_i32_0 : i32, i32
  }
  func.func @transform_2(%arg0: i32) -> (i32, i32) {
    %c0_i32 = arith.constant 0 : i32
    %c0_i32_0 = arith.constant 0 : i32
    %c0_i32_1 = arith.constant 0 : i32
    return %c0_i32, %c0_i32_0 : i32, i32
  }
  func.func @transform_3(%arg0: i32) -> (i32, i32) {
    %c0_i32 = arith.constant 0 : i32
    %c0_i32_0 = arith.constant 0 : i32
    %c0_i32_1 = arith.constant 0 : i32
    return %c0_i32, %c0_i32_0 : i32, i32
  }
  func.func @transform_4(%arg0: i32) -> (i32, i32) {
    %c0_i32 = arith.constant 0 : i32
    %c0_i32_0 = arith.constant 0 : i32
    %c0_i32_1 = arith.constant 0 : i32
    return %c0_i32, %c0_i32_0 : i32, i32
  }
  func.func @transform_5(%arg0: i32) -> (i32, i32) {
    %c0_i32 = arith.constant 0 : i32
    %c0_i32_0 = arith.constant 0 : i32
    return %arg0, %c0_i32 : i32, i32
  }
}

</mosaic_0001>

<llo_original>
// kernel: tpu_custom_call.1
$region0: #{tpu_custom_call.1}
  #allocation0 [shape = 'u32[]', space=smem, size = 0x4, offset = 0x4, fixed_abs, tag = 'smem constant byte address 0x4 - core index']
  #allocation1 [shape = 'u32[72,128]{1,0:T(1,128)}', space=vmem, size = 0x9000, scoped, tag = 'internal scratch']
  %s0 = inlined_call_operand.vmem [shape: f32[16,32], index: 0, kind: input, shape index: {}]
  %s1 = inlined_call_operand.vmem [shape: f32[32,64], index: 1, kind: input, shape index: {}]
  %s2 = inlined_call_operand.vmem [shape: f32[1,64], index: 2, kind: input, shape index: {}]
  %s3 = inlined_call_operand.vmem [shape: f32[64,32], index: 3, kind: input, shape index: {}]
  %s4 = inlined_call_operand.vmem [shape: f32[1,32], index: 4, kind: input, shape index: {}]
  %s5 = inlined_call_operand.hbm [shape: f32[16,32], index: 5, kind: output, shape index: {}]
  %s6 = sld [smem:[#allocation0]]
  $region30: #{tpu_custom_call.1} parent=0
    _
  %s8 = ssub.s32 1, %s6
  %s9 = scalar_select 0, %s8, %s6
  $region1: #{tpu_custom_call.1} parent=0
    #allocation2 [shape = 'u8[8192]{0}', space=vmem, size = 0x2000, scoped, tag = 'output window, operand 0, single buffered']
    #allocation3 [shape = 's32[1]{0}', space=sflag, size = 0x4, scoped, tag = 'scoped memory for tpu_custom_call.1']
    %10 = vsyncpa [#allocation3], 0
    // Predicated region
    $region2: #{tpu_custom_call.1} parent=1 // pred_check
      _
    $region3: #{tpu_custom_call.1} parent=1 // pred_check_branch
      %12 = sbr.rel (0) target = $region5
    $region4: #{tpu_custom_call.1} parent=1 // pred_region
      _
    $region5: #{tpu_custom_call.1} parent=1 // pred_fallthru
      _
    // Predicated region
    $region6: #{tpu_custom_call.1} parent=1 // pred_check
      _
    $region7: #{tpu_custom_call.1} parent=1 // pred_check_branch
      %14 = sbr.rel (0) target = $region9
    $region8: #{tpu_custom_call.1} parent=1 // pred_region
      _
    $region9: #{tpu_custom_call.1} parent=1 // pred_fallthru
      _
    // Predicated region
    $region10: #{tpu_custom_call.1} parent=1 // pred_check
      _
    $region11: #{tpu_custom_call.1} parent=1 // pred_check_branch
      %16 = sbr.rel (0) target = $region13
    $region12: #{tpu_custom_call.1} parent=1 // pred_region
      _
    $region13: #{tpu_custom_call.1} parent=1 // pred_fallthru
      _
    // Predicated region
    $region14: #{tpu_custom_call.1} parent=1 // pred_check
      _
    $region15: #{tpu_custom_call.1} parent=1 // pred_check_branch
      %18 = sbr.rel (0) target = $region17
    $region16: #{tpu_custom_call.1} parent=1 // pred_region
      _
    $region17: #{tpu_custom_call.1} parent=1 // pred_fallthru
      _
    // Predicated region
    $region18: #{tpu_custom_call.1} parent=1 // pred_check
      _
    $region19: #{tpu_custom_call.1} parent=1 // pred_check_branch
      %20 = sbr.rel (0) target = $region21
    $region20: #{tpu_custom_call.1} parent=1 // pred_region
      _
    $region21: #{tpu_custom_call.1} parent=1 // pred_fallthru
      _
    %v21 = vld [vmem:[%s0] sm:$0xff]
    %v22 = vld [vmem:[%s0 + $0x8] sm:$0xff]
    %v23 = vld [vmem:[%s1] sm:$0xff]
    %v24 = vld [vmem:[%s1 + $0x8] sm:$0xff]
    %v25 = vld [vmem:[%s1 + $0x10] sm:$0xff]
    %v26 = vld [vmem:[%s1 + $0x18] sm:$0xff]
    %v27 = vld [vmem:[%s2] sm:$0x1]
    %v29 = vperm.slane %v27, 0
    %vm31 = vcmask 261120
    %v33 = vsel %vm31, %v21, 0
    %v36 = vsel %vm31, %v22, 0
    %38 = vmatpush.msra.mxu0 0.0
    %39 = vmatpush.msra.mxu0 0.0
    %40 = vmatpush.msra.mxu0 0.0
    %41 = vmatpush.msra.mxu0 0.0
    %42 = vmatpush.msra.mxu0 0.0
    %43 = vmatpush.msra.mxu0 0.0
    %44 = vmatpush.msra.mxu0 0.0
    %45 = vmatpush.msra.mxu0 0.0
    %46 = vmatpush.msra.mxu0 0.0
    %47 = vmatpush.msra.mxu0 0.0
    %48 = vmatpush.msra.mxu0 0.0
    %49 = vmatpush.msra.mxu0 0.0
    %50 = vmatpush.msra.mxu0 %v26
    %51 = vmatpush.msra.mxu0 %v25
    %52 = vmatpush.msra.mxu0 %v24
    %53 = vmatpush.msra.mxu0 %v23
    %54 = vmatmul.f32.gmra.mxu0 %v33
    %v55 = vpop.f32.mrf.mxu0
    %v56 = vadd.f32 %v29, %v55
    %57 = vmatmul.f32.gmra.mxu0 %v36
    %v58 = vpop.f32.mrf.mxu0
    %v59 = vadd.f32 %v29, %v58
    %60 = vdwg.mxu0
    %v61 = vmax.f32 %v56, 0.0
    %v62 = vmax.f32 %v59, 0.0
    %v63 = vld [vmem:[%s3] sm:$0xff]
    %v64 = vld [vmem:[%s3 + $0x8] sm:$0xff]
    %v65 = vld [vmem:[%s3 + $0x10] sm:$0xff]
    %v66 = vld [vmem:[%s3 + $0x18] sm:$0xff]
    %v67 = vld [vmem:[%s3 + $0x20] sm:$0xff]
    %v68 = vld [vmem:[%s3 + $0x28] sm:$0xff]
    %v69 = vld [vmem:[%s3 + $0x30] sm:$0xff]
    %v70 = vld [vmem:[%s3 + $0x38] sm:$0xff]
    %v71 = vld [vmem:[%s4] sm:$0x1]
    %v73 = vperm.slane %v71, 0
    %vm75 = vcmask 523264
    %v77 = vsel %vm75, %v61, 0
    %v80 = vsel %vm75, %v62, 0
    %82 = vmatpush.msra.mxu0 0.0
    %83 = vmatpush.msra.mxu0 0.0
    %84 = vmatpush.msra.mxu0 0.0
    %85 = vmatpush.msra.mxu0 0.0
    %86 = vmatpush.msra.mxu0 0.0
    %87 = vmatpush.msra.mxu0 0.0
    %88 = vmatpush.msra.mxu0 0.0
    %89 = vmatpush.msra.mxu0 0.0
    %90 = vmatpush.msra.mxu0 %v70
    %91 = vmatpush.msra.mxu0 %v69
    %92 = vmatpush.msra.mxu0 %v68
    %93 = vmatpush.msra.mxu0 %v67
    %94 = vmatpush.msra.mxu0 %v66
    %95 = vmatpush.msra.mxu0 %v65
    %96 = vmatpush.msra.mxu0 %v64
    %97 = vmatpush.msra.mxu0 %v63
    %98 = vmatmul.f32.gmra.mxu0 %v77
    %v99 = vpop.f32.mrf.mxu0
    %v100 = vadd.f32 %v73, %v99
    %101 = vmatmul.f32.gmra.mxu0 %v80
    %v102 = vpop.f32.mrf.mxu0
    %v103 = vadd.f32 %v73, %v102
    %104 = vdwg.mxu0
    %105 = vst.msk [vmem:[#allocation2] sm:$0xff] %vm31, %v100
    %106 = vst.msk [vmem:[#allocation2 + $0x8] sm:$0xff] %vm31, %v103
    // Predicated region
    $region22: #{tpu_custom_call.1} parent=1 // pred_check
      _
    $region23: #{tpu_custom_call.1} parent=1 // pred_check_branch
      %108 = sbr.rel (0) target = $region25
    $region24: #{tpu_custom_call.1} parent=1 // pred_region
      %110 = vsyncadd [#allocation3], 0
      %s111 = sshll.u32 [#allocation2], 4
      %s112 = int_to_ptr.vmem [resolvable:$true] %s111
      %s113 = sshll.u32 %s5, 4
      %s114 = int_to_ptr.hbm [resolvable:$true] %s113
      %119 = dma.vmem_to_hbm [thread:$0]  %s112, 256, %s114, [#allocation3], 128, 128, 8
    $region25: #{tpu_custom_call.1} parent=1 // pred_fallthru
      _
    // Predicated region
    $region26: #{tpu_custom_call.1} parent=1 // pred_check
      _
    $region27: #{tpu_custom_call.1} parent=1 // pred_check_branch
      %121 = sbr.rel (0) target = $region29
    $region28: #{tpu_custom_call.1} parent=1 // pred_region
      %123 = dma.done [#allocation3], 256
    $region29: #{tpu_custom_call.1} parent=1 // pred_fallthru
      _
    %124 = vsyncpa [#allocation3], 1

</llo_original>
